<compile_context>
chip_gen: v7x
topology: tpu7x:2x2x1
jax: 0.10.0
libtpu: 0.0.40
codegen_flags: <defaults>
</compile_context>

<pallas_src>
import functools

import jax
import jax.numpy as jnp
from jax.experimental import pallas as pl
from jax.experimental.pallas import tpu as pltpu

INPUT_SIZE = 2
HIDDEN_LAYERS = (32, 32)     # hidden_layers argument to CascadeNet.__init__

LANE = 128                   # f32 lane width
SUBLANE = 8                  # f32 sublane width
DEFAULT_BLOCK_ROWS = 1024    # batch tile: multiple of 8, amortizes grid-step overhead


def _round_up(n, m):
    return ((n + m - 1) // m) * m


def _cascade_kernel(n_linear, h_pads, x_ref, wx_all_ref, b_all_ref, *refs):
    """Fused cascade forward for one batch tile.

    refs = (wh_1, ..., wh_{n_linear-1}, o_ref)
      x_ref      : [BT, X_PAD]            zero-padded input tile
      wx_all_ref : [X_PAD, sum(H_PAD)]    all layers' x-parts packed side by side
                                          (layer 0's hidden-part folded in)
      b_all_ref  : [1, sum(H_PAD)]        all biases packed side by side
      wh_i       : [H_{i-1}_PAD, H_i_PAD] hidden-part of layer i (i >= 1)
      o_ref      : [BT, 128]              lane-dense output slab (lane 0 = logit)
    """
    o_ref = refs[-1]
    wh_refs = refs[:-1]

    x = x_ref[...]                                        # [BT, X_PAD]
    # One wide MXU matmul covers every layer's x-contribution + all biases.
    xb = (jnp.dot(x, wx_all_ref[...], preferred_element_type=jnp.float32)
          + b_all_ref[...])                               # [BT, sum(H_PAD)]

    # Lane-aligned offsets (static Python ints -> free slices, no relayout).
    offs = [0]
    for hp in h_pads[:-1]:
        offs.append(offs[-1] + hp)

    # Layer 0: out_prev == x, its hidden-part was folded into wx_all at pack time.
    z0 = xb[:, offs[0]:offs[0] + h_pads[0]]
    out = jnp.tanh(z0) if n_linear > 1 else z0

    for i in range(1, n_linear):
        z = (xb[:, offs[i]:offs[i] + h_pads[i]]
             + jnp.dot(out, wh_refs[i - 1][...], preferred_element_type=jnp.float32))
        out = jnp.tanh(z) if i < n_linear - 1 else z

    o_ref[...] = out.astype(o_ref.dtype)


def init_params(key, hidden_layers=HIDDEN_LAYERS, input_size=INPUT_SIZE):
    """Deterministic PyTorch-shaped params: weight (out, in), bias (out,)."""
    params = []
    prev = input_size
    sizes = list(hidden_layers) + [1]
    for h in sizes:
        fan_in = prev + input_size
        key, kw, kb = jax.random.split(key, 3)
        bound = 1.0 / jnp.sqrt(fan_in)            # nn.Linear default init range
        w = jax.random.uniform(kw, (h, fan_in), jnp.float32, -bound, bound)
        b = jax.random.uniform(kb, (h,), jnp.float32, -bound, bound)
        params.append((w, b))
        prev = h
    return params


def _pack_params(params, input_size=INPUT_SIZE):
    """Split each (out, in) weight into x-part / hidden-part (transposed to
    (in, out)), fold layer 0's hidden-part into its x-part, pack all x-parts and
    biases into one wide lane-aligned matrix, zero-pad everything to vreg-aligned
    shapes (sublane / lane multiples)."""
    x_pad = _round_up(input_size, SUBLANE)
    sizes = [int(w.shape[0]) for (w, _) in params]
    h_pads = [_round_up(h, LANE) for h in sizes]
    total = sum(h_pads)

    wx_all = jnp.zeros((x_pad, total), jnp.float32)
    b_all = jnp.zeros((1, total), jnp.float32)
    wh_list = []

    prev, prev_pad, off = input_size, x_pad, 0
    for li, ((w, b), h, h_pad) in enumerate(zip(params, sizes, h_pads)):
        w = jnp.asarray(w, jnp.float32)
        b = jnp.asarray(b, jnp.float32)
        wx_part = w[:, :input_size].T                     # (input_size, h)
        wh_part = w[:, input_size:].T                     # (prev, h)
        if li == 0:
            # Layer 0's previous output IS x: fold hidden-part into x-part.
            wx_part = wx_part + wh_part
        else:
            wh = jnp.zeros((prev_pad, h_pad), jnp.float32).at[:prev, :h].set(wh_part)
            wh_list.append(wh)
        wx_all = wx_all.at[:input_size, off:off + h].set(wx_part)
        b_all = b_all.at[0, off:off + h].set(b)
        prev, prev_pad, off = h, h_pad, off + h_pad

    return wx_all, b_all, wh_list, x_pad, h_pads


def cascade_net_forward(x, params, block_rows=DEFAULT_BLOCK_ROWS):
    """Pallas-backed CascadeNet forward. x: [B, input_size] float32 -> [B, 1]."""
    batch, input_size = x.shape
    n_linear = len(params)

    wx_all, b_all, wh_list, x_pad, h_pads = _pack_params(params, input_size)
    out_pad = h_pads[-1]

    # Batch tiling: tile size multiple of 8, capped at block_rows; pad remainder.
    bt = min(block_rows, _round_up(batch, SUBLANE))
    b_pad = _round_up(batch, bt)

    xp = jnp.zeros((b_pad, x_pad), jnp.float32).at[:batch, :input_size].set(
        jnp.asarray(x, jnp.float32))

    grid = (b_pad // bt,)

    def const_spec(p):
        # Full-array block, constant index_map -> VMEM-resident, never re-DMA'd.
        return pl.BlockSpec(p.shape, lambda i: (0, 0))

    in_specs = ([pl.BlockSpec((bt, x_pad), lambda i: (i, 0)),
                 const_spec(wx_all), const_spec(b_all)]
                + [const_spec(w) for w in wh_list])
    out_specs = pl.BlockSpec((bt, out_pad), lambda i: (i, 0))

    kernel = functools.partial(_cascade_kernel, n_linear, tuple(h_pads))
    out_full = pl.pallas_call(
        kernel,
        grid=grid,
        in_specs=in_specs,
        out_specs=out_specs,
        out_shape=jax.ShapeDtypeStruct((b_pad, out_pad), jnp.float32),
        compiler_params=pltpu.CompilerParams(
            dimension_semantics=("parallel",)),   # v7x: shard batch across 2 TCs
    )(xp, wx_all, b_all, *wh_list)

    # Lane-dense slab -> real (B, 1) output.
    return out_full[:batch, :1]


def cascade_net_reference(x, params):
    """Pure-JAX reference (mirrors the PyTorch forward), full f32 precision."""
    out = x
    for i, (w, b) in enumerate(params):
        cat = jnp.concatenate([x, out], axis=1)
        z = jnp.dot(cat, w.T, precision=jax.lax.Precision.HIGHEST) + b
        out = jnp.tanh(z) if i < len(params) - 1 else z
    return out


if __name__ == "__main__":
    key = jax.random.PRNGKey(0)
    k_params, k_small, k_large = jax.random.split(key, 3)

    params = init_params(k_params)

    # Small-shape check (single tile).
    x_small = jax.random.normal(k_small, (8, INPUT_SIZE), jnp.float32)
    y_small = jax.block_until_ready(cascade_net_forward(x_small, params))
    y_small_ref = cascade_net_reference(x_small, params)
    assert y_small.shape == (8, 1), y_small.shape
    assert jnp.allclose(y_small, y_small_ref, atol=1e-4, rtol=1e-4)

    # Tiled check: batch not a multiple of the 1024-row tile (exercises grid,
    # pipelining and the remainder-padding path).
    x_large = jax.random.normal(k_large, (2000, INPUT_SIZE), jnp.float32)
    y_large = jax.block_until_ready(cascade_net_forward(x_large, params))
    y_large_ref = cascade_net_reference(x_large, params)
    assert y_large.shape == (2000, 1), y_large.shape
    assert jnp.allclose(y_large, y_large_ref, atol=1e-4, rtol=1e-4)

    print("KERNEL_OK")
</pallas_src>

<mosaic_0001>
module attributes {stable_mosaic.version = 11 : i64} {
  func.func @_cascade_kernel(%arg0: i32, %arg1: memref<8x8xf32, #tpu.memory_space<vmem>>, %arg2: memref<8x384xf32, #tpu.memory_space<vmem>>, %arg3: memref<1x384xf32, #tpu.memory_space<vmem>>, %arg4: memref<128x128xf32, #tpu.memory_space<vmem>>, %arg5: memref<128x128xf32, #tpu.memory_space<vmem>>, %arg6: memref<8x128xf32, #tpu.memory_space<vmem>>) attributes {dimension_semantics = [#tpu.dimension_semantics<parallel>], iteration_bounds = array<i64: 1>, scalar_prefetch = 0 : i64, scratch_operands = 0 : i64, tpu.core_type = #tpu.core_type<tc>, window_params = [{transform_indices = @transform_0, window_bounds = array<i64: 8, 8>}, {pipeline_mode = #tpu.pipeline_mode<synchronous>, transform_indices = @transform_1, window_bounds = array<i64: 8, 384>}, {pipeline_mode = #tpu.pipeline_mode<synchronous>, transform_indices = @transform_2, window_bounds = array<i64: 1, 384>}, {pipeline_mode = #tpu.pipeline_mode<synchronous>, transform_indices = @transform_3, window_bounds = array<i64: 128, 128>}, {pipeline_mode = #tpu.pipeline_mode<synchronous>, transform_indices = @transform_4, window_bounds = array<i64: 128, 128>}, {transform_indices = @transform_5, window_bounds = array<i64: 8, 128>}]} {
    %c0 = arith.constant 0 : index
    %c0_0 = arith.constant 0 : index
    %0 = vector.load %arg1[%c0, %c0_0] : memref<8x8xf32, #tpu.memory_space<vmem>>, vector<8x8xf32>
    %c0_1 = arith.constant 0 : index
    %c0_2 = arith.constant 0 : index
    %1 = vector.load %arg2[%c0_1, %c0_2] : memref<8x384xf32, #tpu.memory_space<vmem>>, vector<8x384xf32>
    %cst = arith.constant dense<0.000000e+00> : vector<8x384xf32>
    %2 = tpu.matmul %0, %1, %cst {dimension_numbers = #tpu.dot_dimension_numbers<[1], [0], [0], [1], [0, 0, 1, 1], [], []>} : vector<8x8xf32>, vector<8x384xf32>, vector<8x384xf32> -> vector<8x384xf32>
    %c0_3 = arith.constant 0 : index
    %c0_4 = arith.constant 0 : index
    %3 = vector.load %arg3[%c0_3, %c0_4] : memref<1x384xf32, #tpu.memory_space<vmem>>, vector<1x384xf32>
    %4 = vector.broadcast %3 : vector<1x384xf32> to vector<8x384xf32>
    %5 = arith.addf %2, %4 : vector<8x384xf32>
    %6 = vector.extract_strided_slice %5 {offsets = [0, 0], sizes = [8, 128], strides = [1, 1]} : vector<8x384xf32> to vector<8x128xf32>
    %7 = math.tanh %6 : vector<8x128xf32>
    %8 = vector.extract_strided_slice %5 {offsets = [0, 128], sizes = [8, 128], strides = [1, 1]} : vector<8x384xf32> to vector<8x128xf32>
    %c0_5 = arith.constant 0 : index
    %c0_6 = arith.constant 0 : index
    %9 = vector.load %arg4[%c0_5, %c0_6] : memref<128x128xf32, #tpu.memory_space<vmem>>, vector<128x128xf32>
    %cst_7 = arith.constant dense<0.000000e+00> : vector<8x128xf32>
    %10 = tpu.matmul %7, %9, %cst_7 {dimension_numbers = #tpu.dot_dimension_numbers<[1], [0], [0], [1], [0, 0, 1, 1], [], []>} : vector<8x128xf32>, vector<128x128xf32>, vector<8x128xf32> -> vector<8x128xf32>
    %11 = arith.addf %8, %10 : vector<8x128xf32>
    %12 = math.tanh %11 : vector<8x128xf32>
    %13 = vector.extract_strided_slice %5 {offsets = [0, 256], sizes = [8, 128], strides = [1, 1]} : vector<8x384xf32> to vector<8x128xf32>
    %c0_8 = arith.constant 0 : index
    %c0_9 = arith.constant 0 : index
    %14 = vector.load %arg5[%c0_8, %c0_9] : memref<128x128xf32, #tpu.memory_space<vmem>>, vector<128x128xf32>
    %cst_10 = arith.constant dense<0.000000e+00> : vector<8x128xf32>
    %15 = tpu.matmul %12, %14, %cst_10 {dimension_numbers = #tpu.dot_dimension_numbers<[1], [0], [0], [1], [0, 0, 1, 1], [], []>} : vector<8x128xf32>, vector<128x128xf32>, vector<8x128xf32> -> vector<8x128xf32>
    %16 = arith.addf %13, %15 : vector<8x128xf32>
    %c0_11 = arith.constant 0 : index
    %c0_12 = arith.constant 0 : index
    %17 = vector.load %arg6[%c0_11, %c0_12] : memref<8x128xf32, #tpu.memory_space<vmem>>, vector<8x128xf32>
    tpu.vector_store %arg6[%c0_11, %c0_12], %16 {strides = array<i32>} : memref<8x128xf32, #tpu.memory_space<vmem>>, vector<8x128xf32>,
    return
  }
  func.func @transform_0(%arg0: i32) -> (i32, i32) {
    %c0_i32 = arith.constant 0 : i32
    %c0_i32_0 = arith.constant 0 : i32
    return %arg0, %c0_i32 : i32, i32
  }
  func.func @transform_1(%arg0: i32) -> (i32, i32) {
    %c0_i32 = arith.constant 0 : i32
    %c0_i32_0 = arith.constant 0 : i32
    %c0_i32_1 = arith.constant 0 : i32
    return %c0_i32, %c0_i32_0 : i32, i32
  }
  func.func @transform_2(%arg0: i32) -> (i32, i32) {
    %c0_i32 = arith.constant 0 : i32
    %c0_i32_0 = arith.constant 0 : i32
    %c0_i32_1 = arith.constant 0 : i32
    return %c0_i32, %c0_i32_0 : i32, i32
  }
  func.func @transform_3(%arg0: i32) -> (i32, i32) {
    %c0_i32 = arith.constant 0 : i32
    %c0_i32_0 = arith.constant 0 : i32
    %c0_i32_1 = arith.constant 0 : i32
    return %c0_i32, %c0_i32_0 : i32, i32
  }
  func.func @transform_4(%arg0: i32) -> (i32, i32) {
    %c0_i32 = arith.constant 0 : i32
    %c0_i32_0 = arith.constant 0 : i32
    %c0_i32_1 = arith.constant 0 : i32
    return %c0_i32, %c0_i32_0 : i32, i32
  }
  func.func @transform_5(%arg0: i32) -> (i32, i32) {
    %c0_i32 = arith.constant 0 : i32
    %c0_i32_0 = arith.constant 0 : i32
    return %arg0, %c0_i32 : i32, i32
  }
}

</mosaic_0001>

<llo_original>
// kernel: tpu_custom_call.1
$region0: #{tpu_custom_call.1}
  #allocation0 [shape = 'u32[]', space=smem, size = 0x4, offset = 0x4, fixed_abs, tag = 'smem constant byte address 0x4 - core index']
  #allocation1 [shape = 'u32[144,128]{1,0:T(1,128)}', space=vmem, size = 0x12000, scoped, tag = 'internal scratch']
  %s0 = inlined_call_operand.hbm [shape: f32[8,8], index: 0, kind: input, shape index: {}]
  %s1 = inlined_call_operand.hbm [shape: f32[8,384], index: 1, kind: input, shape index: {}]
  %s2 = inlined_call_operand.vmem [shape: f32[1,384], index: 2, kind: input, shape index: {}]
  %s3 = inlined_call_operand.hbm [shape: f32[128,128], index: 3, kind: input, shape index: {}]
  %s4 = inlined_call_operand.hbm [shape: f32[128,128], index: 4, kind: input, shape index: {}]
  %s5 = inlined_call_operand.hbm [shape: f32[8,128], index: 5, kind: output, shape index: {}]
  %s6 = sld [smem:[#allocation0]]
  $region46: #{tpu_custom_call.1} parent=0
    _
  %s8 = ssub.s32 1, %s6
  %s9 = scalar_select 0, %s8, %s6
  $region1: #{tpu_custom_call.1} parent=0
    #allocation2 [shape = 'u8[4096]{0}', space=vmem, size = 0x1000, scoped, tag = 'input window, operand 0, single buffered']
    #allocation3 [shape = 's32[1]{0}', space=sflag, size = 0x4, scoped, tag = 'scoped memory for tpu_custom_call.1']
    #allocation4 [shape = 's32[1]{0}', space=sflag, size = 0x4, scoped, tag = 'scoped memory for tpu_custom_call.1']
    #allocation5 [shape = 'u8[12288]{0}', space=vmem, size = 0x3000, scoped, tag = 'input window, operand 1, single buffered']
    #allocation6 [shape = 's32[1]{0}', space=sflag, size = 0x4, scoped, tag = 'scoped memory for tpu_custom_call.1']
    #allocation7 [shape = 'u8[65536]{0}', space=vmem, size = 0x10000, scoped, tag = 'input window, operand 3, single buffered']
    #allocation8 [shape = 'u8[65536]{0}', space=vmem, size = 0x10000, scoped, tag = 'input window, operand 4, single buffered']
    #allocation9 [shape = 's32[1]{0}', space=sflag, size = 0x4, scoped, tag = 'scoped memory for tpu_custom_call.1']
    #allocation10 [shape = 'u8[4096]{0}', space=vmem, size = 0x1000, scoped, tag = 'output window, operand 0, single buffered']
    %10 = vsyncpa [#allocation3], 0
    %11 = vsyncpa [#allocation6], 0
    %12 = vsyncpa [#allocation9], 0
    %13 = vsyncpa [#allocation4], 0
    // Predicated region
    $region2: #{tpu_custom_call.1} parent=1 // pred_check
      _
    $region3: #{tpu_custom_call.1} parent=1 // pred_check_branch
      %15 = sbr.rel (0) target = $region5
    $region4: #{tpu_custom_call.1} parent=1 // pred_region
      %s17 = ssub.s32 128, 128
      %18 = vsyncadd [#allocation3], %s17
      %s20 = sshll.u32 [#allocation2], 4
      %s21 = int_to_ptr.vmem [resolvable:$true] %s20
      %23 = dma.hbm_to_vmem [thread:$0]  %s0, 128, %s21, [#allocation3]
    $region5: #{tpu_custom_call.1} parent=1 // pred_fallthru
      _
    // Predicated region
    $region6: #{tpu_custom_call.1} parent=1 // pred_check
      _
    $region7: #{tpu_custom_call.1} parent=1 // pred_check_branch
      %25 = sbr.rel (0) target = $region9
    $region8: #{tpu_custom_call.1} parent=1 // pred_region
      %s27 = ssub.s32 384, 384
      %28 = vsyncadd [#allocation6], %s27
      %s30 = sshll.u32 [#allocation5], 4
      %s31 = int_to_ptr.vmem [resolvable:$true] %s30
      %33 = dma.hbm_to_vmem [thread:$0]  %s1, 384, %s31, [#allocation6]
    $region9: #{tpu_custom_call.1} parent=1 // pred_fallthru
      _
    // Predicated region
    $region10: #{tpu_custom_call.1} parent=1 // pred_check
      _
    $region11: #{tpu_custom_call.1} parent=1 // pred_check_branch
      %35 = sbr.rel (0) target = $region13
    $region12: #{tpu_custom_call.1} parent=1 // pred_region
      _
    $region13: #{tpu_custom_call.1} parent=1 // pred_fallthru
      _
    // Predicated region
    $region14: #{tpu_custom_call.1} parent=1 // pred_check
      _
    $region15: #{tpu_custom_call.1} parent=1 // pred_check_branch
      %37 = sbr.rel (0) target = $region17
    $region16: #{tpu_custom_call.1} parent=1 // pred_region
      %s39 = ssub.s32 2048, 2048
      %40 = vsyncadd [#allocation6], %s39
      %s41 = sshll.u32 [#allocation7], 4
      %s42 = int_to_ptr.vmem [resolvable:$true] %s41
      %47 = dma.hbm_to_vmem [thread:$0]  %s3, 2048, %s42, [#allocation6], 128, 128, 8
    $region17: #{tpu_custom_call.1} parent=1 // pred_fallthru
      _
    // Predicated region
    $region18: #{tpu_custom_call.1} parent=1 // pred_check
      _
    $region19: #{tpu_custom_call.1} parent=1 // pred_check_branch
      %49 = sbr.rel (0) target = $region21
    $region20: #{tpu_custom_call.1} parent=1 // pred_region
      %s51 = ssub.s32 2048, 2048
      %52 = vsyncadd [#allocation9], %s51
      %s53 = sshll.u32 [#allocation8], 4
      %s54 = int_to_ptr.vmem [resolvable:$true] %s53
      %59 = dma.hbm_to_vmem [thread:$0]  %s4, 2048, %s54, [#allocation9], 128, 128, 8
    $region21: #{tpu_custom_call.1} parent=1 // pred_fallthru
      _
    // Predicated region
    $region22: #{tpu_custom_call.1} parent=1 // pred_check
      _
    $region23: #{tpu_custom_call.1} parent=1 // pred_check_branch
      %61 = sbr.rel (0) target = $region25
    $region24: #{tpu_custom_call.1} parent=1 // pred_region
      %62 = dma.done [#allocation3], 128
    $region25: #{tpu_custom_call.1} parent=1 // pred_fallthru
      _
    // Predicated region
    $region26: #{tpu_custom_call.1} parent=1 // pred_check
      _
    $region27: #{tpu_custom_call.1} parent=1 // pred_check_branch
      %64 = sbr.rel (0) target = $region29
    $region28: #{tpu_custom_call.1} parent=1 // pred_region
      %65 = dma.done [#allocation6], 384
    $region29: #{tpu_custom_call.1} parent=1 // pred_fallthru
      _
    // Predicated region
    $region30: #{tpu_custom_call.1} parent=1 // pred_check
      _
    $region31: #{tpu_custom_call.1} parent=1 // pred_check_branch
      %67 = sbr.rel (0) target = $region33
    $region32: #{tpu_custom_call.1} parent=1 // pred_region
      %68 = dma.done [#allocation6], 2048
    $region33: #{tpu_custom_call.1} parent=1 // pred_fallthru
      _
    // Predicated region
    $region34: #{tpu_custom_call.1} parent=1 // pred_check
      _
    $region35: #{tpu_custom_call.1} parent=1 // pred_check_branch
      %70 = sbr.rel (0) target = $region37
    $region36: #{tpu_custom_call.1} parent=1 // pred_region
      %71 = dma.done [#allocation9], 2048
    $region37: #{tpu_custom_call.1} parent=1 // pred_fallthru
      _
    %v72 = vld [vmem:[#allocation2] sm:$0xff]
    %v73 = vld [vmem:[#allocation5] sm:$0xff]
    %v74 = vld [vmem:[#allocation5 + $0x8] sm:$0xff]
    %v75 = vld [vmem:[#allocation5 + $0x10] sm:$0xff]
    %v76 = vld [vmem:[%s2] sm:$0x7]
    %v78 = vlaneseq
    %v79 = vshrl.u32 %v78, 7
    %v80 = vsub.s32 0, %v79
    %v81 = vrot.slane %v76, %v80
    %v82 = vlaneseq
    %v83 = vshrl.u32 %v82, 7
    %v84 = vsub.s32 1, %v83
    %v85 = vrot.slane %v76, %v84
    %v86 = vlaneseq
    %v87 = vshrl.u32 %v86, 7
    %v88 = vsub.s32 2, %v87
    %v89 = vrot.slane %v76, %v88
    %vm93 = vcmask 64512
    %v95 = vsel %vm93, %v72, 0
    %97 = vmatprep.subr.mxu0 %v74
    %98 = vmatpush1.msra.mxu0 %v73
    %99 = vmatprep.subr.mxu0 0.0
    %100 = vmatpush1.msra.mxu0 0.0
    %101 = vmatprep.subr.mxu0 0.0
    %102 = vmatpush1.msra.mxu0 0.0
    %103 = vmatprep.subr.mxu0 0.0
    %104 = vmatpush1.msra.mxu0 0.0
    %105 = vmatprep.subr.mxu0 0.0
    %106 = vmatpush1.msra.mxu0 0.0
    %107 = vmatprep.subr.mxu0 0.0
    %108 = vmatpush1.msra.mxu0 0.0
    %109 = vmatprep.subr.mxu0 0.0
    %110 = vmatpush1.msra.mxu0 0.0
    %111 = vmatprep.subr.mxu0 0.0
    %112 = vmatpush1.msra.mxu0 0.0
    %113 = vmatprep.subr.mxu0 0.0
    %114 = vmatpush1.msra.mxu0 0.0
    %115 = vmatprep.subr.mxu0 0.0
    %116 = vmatpush1.msra.mxu0 0.0
    %117 = vmatprep.subr.mxu0 0.0
    %118 = vmatpush1.msra.mxu0 0.0
    %119 = vmatprep.subr.mxu0 0.0
    %120 = vmatpush1.msra.mxu0 0.0
    %121 = vmatprep.subr.mxu0 0.0
    %122 = vmatpush1.msra.mxu0 0.0
    %123 = vmatprep.subr.mxu0 0.0
    %124 = vmatpush1.msra.mxu0 0.0
    %125 = vmatprep.subr.mxu0 0.0
    %126 = vmatpush1.msra.mxu0 0.0
    %127 = vmatprep.subr.mxu0 0.0
    %128 = vmatpush1.msra.mxu0 0.0
    %129 = vmatprep.subr.mxu0 0.0
    %130 = vmatpush1.msra.mxu0 0.0
    %131 = vmatprep.subr.mxu0 0.0
    %132 = vmatpush1.msra.mxu0 0.0
    %133 = vmatprep.subr.mxu0 0.0
    %134 = vmatpush1.msra.mxu0 0.0
    %135 = vmatprep.subr.mxu0 0.0
    %136 = vmatpush1.msra.mxu0 0.0
    %137 = vmatprep.subr.mxu0 0.0
    %138 = vmatpush1.msra.mxu0 0.0
    %139 = vmatprep.subr.mxu0 0.0
    %140 = vmatpush1.msra.mxu0 0.0
    %141 = vmatprep.subr.mxu0 0.0
    %142 = vmatpush1.msra.mxu0 0.0
    %143 = vmatprep.subr.mxu0 0.0
    %144 = vmatpush1.msra.mxu0 0.0
    %145 = vmatprep.subr.mxu0 0.0
    %146 = vmatpush1.msra.mxu0 0.0
    %147 = vmatprep.subr.mxu0 0.0
    %148 = vmatpush1.msra.mxu0 0.0
    %149 = vmatprep.subr.mxu0 0.0
    %150 = vmatpush1.msra.mxu0 0.0
    %151 = vmatprep.subr.mxu0 0.0
    %152 = vmatpush1.msra.mxu0 0.0
    %153 = vmatprep.subr.mxu0 0.0
    %154 = vmatpush1.msra.mxu0 0.0
    %155 = vmatprep.subr.mxu0 0.0
    %156 = vmatpush1.msra.mxu0 0.0
    %157 = vmatprep.subr.mxu0 0.0
    %158 = vmatpush1.msra.mxu0 0.0
    %159 = vmatprep.subr.mxu0 0.0
    %160 = vmatpush1.msra.mxu0 0.0
    %161 = vmatprep.mubr.f32.mxu0 0.0
    %162 = vmatmul.mubr.f32.gmra.mrb[0].mxu0 %v95
    %v163 = vpop.f32.mrb[0].mxu0
    %v164 = vadd.f32 %v81, %v163
    %v165 = vpop.f32.mrb[0].mxu0
    %v166 = vadd.f32 %v85, %v165
    %167 = vdwg.mxu0
    %168 = vmatprep.subr.mxu0 0.0
    %169 = vmatpush1.msra.mxu0 %v75
    %170 = vmatprep.subr.mxu0 0.0
    %171 = vmatpush1.msra.mxu0 0.0
    %172 = vmatprep.subr.mxu0 0.0
    %173 = vmatpush1.msra.mxu0 0.0
    %174 = vmatprep.subr.mxu0 0.0
    %175 = vmatpush1.msra.mxu0 0.0
    %176 = vmatprep.subr.mxu0 0.0
    %177 = vmatpush1.msra.mxu0 0.0
    %178 = vmatprep.subr.mxu0 0.0
    %179 = vmatpush1.msra.mxu0 0.0
    %180 = vmatprep.subr.mxu0 0.0
    %181 = vmatpush1.msra.mxu0 0.0
    %182 = vmatprep.subr.mxu0 0.0
    %183 = vmatpush1.msra.mxu0 0.0
    %184 = vmatprep.subr.mxu0 0.0
    %185 = vmatpush1.msra.mxu0 0.0
    %186 = vmatprep.subr.mxu0 0.0
    %187 = vmatpush1.msra.mxu0 0.0
    %188 = vmatprep.subr.mxu0 0.0
    %189 = vmatpush1.msra.mxu0 0.0
    %190 = vmatprep.subr.mxu0 0.0
    %191 = vmatpush1.msra.mxu0 0.0
    %192 = vmatprep.subr.mxu0 0.0
    %193 = vmatpush1.msra.mxu0 0.0
    %194 = vmatprep.subr.mxu0 0.0
    %195 = vmatpush1.msra.mxu0 0.0
    %196 = vmatprep.subr.mxu0 0.0
    %197 = vmatpush1.msra.mxu0 0.0
    %198 = vmatprep.subr.mxu0 0.0
    %199 = vmatpush1.msra.mxu0 0.0
    %200 = vmatprep.subr.mxu0 0.0
    %201 = vmatpush1.msra.mxu0 0.0
    %202 = vmatprep.subr.mxu0 0.0
    %203 = vmatpush1.msra.mxu0 0.0
    %204 = vmatprep.subr.mxu0 0.0
    %205 = vmatpush1.msra.mxu0 0.0
    %206 = vmatprep.subr.mxu0 0.0
    %207 = vmatpush1.msra.mxu0 0.0
    %208 = vmatprep.subr.mxu0 0.0
    %209 = vmatpush1.msra.mxu0 0.0
    %210 = vmatprep.subr.mxu0 0.0
    %211 = vmatpush1.msra.mxu0 0.0
    %212 = vmatprep.subr.mxu0 0.0
    %213 = vmatpush1.msra.mxu0 0.0
    %214 = vmatprep.subr.mxu0 0.0
    %215 = vmatpush1.msra.mxu0 0.0
    %216 = vmatprep.subr.mxu0 0.0
    %217 = vmatpush1.msra.mxu0 0.0
    %218 = vmatprep.subr.mxu0 0.0
    %219 = vmatpush1.msra.mxu0 0.0
    %220 = vmatprep.subr.mxu0 0.0
    %221 = vmatpush1.msra.mxu0 0.0
    %222 = vmatprep.subr.mxu0 0.0
    %223 = vmatpush1.msra.mxu0 0.0
    %224 = vmatprep.subr.mxu0 0.0
    %225 = vmatpush1.msra.mxu0 0.0
    %226 = vmatprep.subr.mxu0 0.0
    %227 = vmatpush1.msra.mxu0 0.0
    %228 = vmatprep.subr.mxu0 0.0
    %229 = vmatpush1.msra.mxu0 0.0
    %230 = vmatprep.subr.mxu0 0.0
    %231 = vmatpush1.msra.mxu0 0.0
    %232 = vmatprep.mubr.f32.mxu0 0.0
    %233 = vmatmul.mubr.f32.gmra.mrb[0].mxu0 %v95
    %v234 = vpop.f32.mrb[0].mxu0
    %v235 = vadd.f32 %v89, %v234
    %v236 = vpop.f32.mrb[0].mxu0
    %237 = vdwg.mxu0
    %v238 = vtanh.pop %v164
    %v239 = vld [vmem:[#allocation7] sm:$0xff]
    %v240 = vld [vmem:[#allocation7 + $0x8] sm:$0xff]
    %v241 = vld [vmem:[#allocation7 + $0x10] sm:$0xff]
    %v242 = vld [vmem:[#allocation7 + $0x18] sm:$0xff]
    %v243 = vld [vmem:[#allocation7 + $0x20] sm:$0xff]
    %v244 = vld [vmem:[#allocation7 + $0x28] sm:$0xff]
    %v245 = vld [vmem:[#allocation7 + $0x30] sm:$0xff]
    %v246 = vld [vmem:[#allocation7 + $0x38] sm:$0xff]
    %v247 = vld [vmem:[#allocation7 + $0x40] sm:$0xff]
    %v248 = vld [vmem:[#allocation7 + $0x48] sm:$0xff]
    %v249 = vld [vmem:[#allocation7 + $0x50] sm:$0xff]
    %v250 = vld [vmem:[#allocation7 + $0x58] sm:$0xff]
    %v251 = vld [vmem:[#allocation7 + $0x60] sm:$0xff]
    %v252 = vld [vmem:[#allocation7 + $0x68] sm:$0xff]
    %v253 = vld [vmem:[#allocation7 + $0x70] sm:$0xff]
    %v254 = vld [vmem:[#allocation7 + $0x78] sm:$0xff]
    %255 = vmatprep.subr.mxu0 0.0
    %256 = vmatpush1.msra.mxu0 %v239
    %257 = vmatprep.subr.mxu0 0.0
    %258 = vmatpush1.msra.mxu0 %v240
    %259 = vmatprep.subr.mxu0 0.0
    %260 = vmatpush1.msra.mxu0 %v241
    %261 = vmatprep.subr.mxu0 0.0
    %262 = vmatpush1.msra.mxu0 %v242
    %263 = vmatprep.subr.mxu0 0.0
    %264 = vmatpush1.msra.mxu0 %v243
    %265 = vmatprep.subr.mxu0 0.0
    %266 = vmatpush1.msra.mxu0 %v244
    %267 = vmatprep.subr.mxu0 0.0
    %268 = vmatpush1.msra.mxu0 %v245
    %269 = vmatprep.subr.mxu0 0.0
    %270 = vmatpush1.msra.mxu0 %v246
    %271 = vmatprep.subr.mxu0 0.0
    %272 = vmatpush1.msra.mxu0 %v247
    %273 = vmatprep.subr.mxu0 0.0
    %274 = vmatpush1.msra.mxu0 %v248
    %275 = vmatprep.subr.mxu0 0.0
    %276 = vmatpush1.msra.mxu0 %v249
    %277 = vmatprep.subr.mxu0 0.0
    %278 = vmatpush1.msra.mxu0 %v250
    %279 = vmatprep.subr.mxu0 0.0
    %280 = vmatpush1.msra.mxu0 %v251
    %281 = vmatprep.subr.mxu0 0.0
    %282 = vmatpush1.msra.mxu0 %v252
    %283 = vmatprep.subr.mxu0 0.0
    %284 = vmatpush1.msra.mxu0 %v253
    %285 = vmatprep.subr.mxu0 0.0
    %286 = vmatpush1.msra.mxu0 %v254
    %287 = vmatprep.subr.mxu0 0.0
    %288 = vmatpush1.msra.mxu0 0.0
    %289 = vmatprep.subr.mxu0 0.0
    %290 = vmatpush1.msra.mxu0 0.0
    %291 = vmatprep.subr.mxu0 0.0
    %292 = vmatpush1.msra.mxu0 0.0
    %293 = vmatprep.subr.mxu0 0.0
    %294 = vmatpush1.msra.mxu0 0.0
    %295 = vmatprep.subr.mxu0 0.0
    %296 = vmatpush1.msra.mxu0 0.0
    %297 = vmatprep.subr.mxu0 0.0
    %298 = vmatpush1.msra.mxu0 0.0
    %299 = vmatprep.subr.mxu0 0.0
    %300 = vmatpush1.msra.mxu0 0.0
    %301 = vmatprep.subr.mxu0 0.0
    %302 = vmatpush1.msra.mxu0 0.0
    %303 = vmatprep.subr.mxu0 0.0
    %304 = vmatpush1.msra.mxu0 0.0
    %305 = vmatprep.subr.mxu0 0.0
    %306 = vmatpush1.msra.mxu0 0.0
    %307 = vmatprep.subr.mxu0 0.0
    %308 = vmatpush1.msra.mxu0 0.0
    %309 = vmatprep.subr.mxu0 0.0
    %310 = vmatpush1.msra.mxu0 0.0
    %311 = vmatprep.subr.mxu0 0.0
    %312 = vmatpush1.msra.mxu0 0.0
    %313 = vmatprep.subr.mxu0 0.0
    %314 = vmatpush1.msra.mxu0 0.0
    %315 = vmatprep.subr.mxu0 0.0
    %316 = vmatpush1.msra.mxu0 0.0
    %317 = vmatprep.subr.mxu0 0.0
    %318 = vmatpush1.msra.mxu0 0.0
    %319 = vmatprep.mubr.f32.mxu0 0.0
    %320 = vmatmul.mubr.f32.gmra.mrb[0].mxu0 %v238
    %v321 = vpop.f32.mrb[0].mxu0
    %v322 = vadd.f32 0.0, %v321
    %v323 = vpop.f32.mrb[0].mxu0
    %324 = vdwg.mxu0
    %v325 = vadd.f32 %v166, %v322
    %v326 = vtanh.pop %v325
    %v327 = vld [vmem:[#allocation8] sm:$0xff]
    %v328 = vld [vmem:[#allocation8 + $0x8] sm:$0xff]
    %v329 = vld [vmem:[#allocation8 + $0x10] sm:$0xff]
    %v330 = vld [vmem:[#allocation8 + $0x18] sm:$0xff]
    %v331 = vld [vmem:[#allocation8 + $0x20] sm:$0xff]
    %v332 = vld [vmem:[#allocation8 + $0x28] sm:$0xff]
    %v333 = vld [vmem:[#allocation8 + $0x30] sm:$0xff]
    %v334 = vld [vmem:[#allocation8 + $0x38] sm:$0xff]
    %v335 = vld [vmem:[#allocation8 + $0x40] sm:$0xff]
    %v336 = vld [vmem:[#allocation8 + $0x48] sm:$0xff]
    %v337 = vld [vmem:[#allocation8 + $0x50] sm:$0xff]
    %v338 = vld [vmem:[#allocation8 + $0x58] sm:$0xff]
    %v339 = vld [vmem:[#allocation8 + $0x60] sm:$0xff]
    %v340 = vld [vmem:[#allocation8 + $0x68] sm:$0xff]
    %v341 = vld [vmem:[#allocation8 + $0x70] sm:$0xff]
    %v342 = vld [vmem:[#allocation8 + $0x78] sm:$0xff]
    %343 = vmatprep.subr.mxu0 0.0
    %344 = vmatpush1.msra.mxu0 %v327
    %345 = vmatprep.subr.mxu0 0.0
    %346 = vmatpush1.msra.mxu0 %v328
    %347 = vmatprep.subr.mxu0 0.0
    %348 = vmatpush1.msra.mxu0 %v329
    %349 = vmatprep.subr.mxu0 0.0
    %350 = vmatpush1.msra.mxu0 %v330
    %351 = vmatprep.subr.mxu0 0.0
    %352 = vmatpush1.msra.mxu0 %v331
    %353 = vmatprep.subr.mxu0 0.0
    %354 = vmatpush1.msra.mxu0 %v332
    %355 = vmatprep.subr.mxu0 0.0
    %356 = vmatpush1.msra.mxu0 %v333
    %357 = vmatprep.subr.mxu0 0.0
    %358 = vmatpush1.msra.mxu0 %v334
    %359 = vmatprep.subr.mxu0 0.0
    %360 = vmatpush1.msra.mxu0 %v335
    %361 = vmatprep.subr.mxu0 0.0
    %362 = vmatpush1.msra.mxu0 %v336
    %363 = vmatprep.subr.mxu0 0.0
    %364 = vmatpush1.msra.mxu0 %v337
    %365 = vmatprep.subr.mxu0 0.0
    %366 = vmatpush1.msra.mxu0 %v338
    %367 = vmatprep.subr.mxu0 0.0
    %368 = vmatpush1.msra.mxu0 %v339
    %369 = vmatprep.subr.mxu0 0.0
    %370 = vmatpush1.msra.mxu0 %v340
    %371 = vmatprep.subr.mxu0 0.0
    %372 = vmatpush1.msra.mxu0 %v341
    %373 = vmatprep.subr.mxu0 0.0
    %374 = vmatpush1.msra.mxu0 %v342
    %375 = vmatprep.subr.mxu0 0.0
    %376 = vmatpush1.msra.mxu0 0.0
    %377 = vmatprep.subr.mxu0 0.0
    %378 = vmatpush1.msra.mxu0 0.0
    %379 = vmatprep.subr.mxu0 0.0
    %380 = vmatpush1.msra.mxu0 0.0
    %381 = vmatprep.subr.mxu0 0.0
    %382 = vmatpush1.msra.mxu0 0.0
    %383 = vmatprep.subr.mxu0 0.0
    %384 = vmatpush1.msra.mxu0 0.0
    %385 = vmatprep.subr.mxu0 0.0
    %386 = vmatpush1.msra.mxu0 0.0
    %387 = vmatprep.subr.mxu0 0.0
    %388 = vmatpush1.msra.mxu0 0.0
    %389 = vmatprep.subr.mxu0 0.0
    %390 = vmatpush1.msra.mxu0 0.0
    %391 = vmatprep.subr.mxu0 0.0
    %392 = vmatpush1.msra.mxu0 0.0
    %393 = vmatprep.subr.mxu0 0.0
    %394 = vmatpush1.msra.mxu0 0.0
    %395 = vmatprep.subr.mxu0 0.0
    %396 = vmatpush1.msra.mxu0 0.0
    %397 = vmatprep.subr.mxu0 0.0
    %398 = vmatpush1.msra.mxu0 0.0
    %399 = vmatprep.subr.mxu0 0.0
    %400 = vmatpush1.msra.mxu0 0.0
    %401 = vmatprep.subr.mxu0 0.0
    %402 = vmatpush1.msra.mxu0 0.0
    %403 = vmatprep.subr.mxu0 0.0
    %404 = vmatpush1.msra.mxu0 0.0
    %405 = vmatprep.subr.mxu0 0.0
    %406 = vmatpush1.msra.mxu0 0.0
    %407 = vmatprep.mubr.f32.mxu0 0.0
    %408 = vmatmul.mubr.f32.gmra.mrb[0].mxu0 %v326
    %v409 = vpop.f32.mrb[0].mxu0
    %v410 = vadd.f32 0.0, %v409
    %v411 = vpop.f32.mrb[0].mxu0
    %412 = vdwg.mxu0
    %v413 = vadd.f32 %v235, %v410
    %414 = vst [vmem:[#allocation10] sm:$0xff] %v413
    // Predicated region
    $region38: #{tpu_custom_call.1} parent=1 // pred_check
      _
    $region39: #{tpu_custom_call.1} parent=1 // pred_check_branch
      %416 = sbr.rel (0) target = $region41
    $region40: #{tpu_custom_call.1} parent=1 // pred_region
      %s418 = ssub.s32 128, 128
      %419 = vsyncadd [#allocation4], %s418
      %s421 = sshll.u32 [#allocation10], 4
      %s422 = int_to_ptr.vmem [resolvable:$true] %s421
      %424 = dma.vmem_to_hbm [thread:$0]  %s422, 128, %s5, [#allocation4]
    $region41: #{tpu_custom_call.1} parent=1 // pred_fallthru
      _
    // Predicated region
    $region42: #{tpu_custom_call.1} parent=1 // pred_check
      _
    $region43: #{tpu_custom_call.1} parent=1 // pred_check_branch
      %426 = sbr.rel (0) target = $region45
    $region44: #{tpu_custom_call.1} parent=1 // pred_region
      %427 = dma.done [#allocation4], 128
    $region45: #{tpu_custom_call.1} parent=1 // pred_fallthru
      _
    %428 = vsyncpa [#allocation3], 1
    %429 = vsyncpa [#allocation6], 1
    %430 = vsyncpa [#allocation9], 1
    %431 = vsyncpa [#allocation4], 1

</llo_original>
